<compile_context>
chip_gen: v7x
topology: tpu7x:2x2x1
jax: 0.10.0
libtpu: 0.0.40
codegen_flags: <defaults>
</compile_context>

<pallas_src>
import jax
import jax.numpy as jnp
from jax.experimental import pallas as pl
from jax.experimental.pallas import tpu as pltpu

K_PAD = 8    # input features padded 6 -> 8 (aligned contraction dim)
OUT_PAD = 8  # output features padded 4 -> 8 (aligned output sublanes)


def _round_up(x, m):
    return (x + m - 1) // m * m


def _cdiv(a, b):
    return -(-a // b)


def mlp_kernel(xT_ref, w1_ref, b1_ref, w2_ref, b2_ref, w3_ref, b3_ref, oT_ref):
    """Feature-major MLP: activations are (features, batch_tile)."""
    # log10 input transform (EUP), dense over the (K_PAD, tb) tile.
    x = jnp.log10(xT_ref[...]).astype(w1_ref.dtype)                 # (8, tb)

    # Layer 1: (256, 8) @ (8, tb) short-K MXU dot, f32 accumulation.
    h = jnp.dot(w1_ref[...], x,
                preferred_element_type=jnp.float32) + b1_ref[...]   # (256, tb)
    h = jnp.maximum(h, 0.01 * h)                                     # LeakyReLU

    # Layer 2: (256, 256) @ (256, tb), bf16 operands / f32 accumulation.
    h = jnp.dot(w2_ref[...], h.astype(w2_ref.dtype),
                preferred_element_type=jnp.float32) + b2_ref[...]    # (256, tb)
    h = jnp.maximum(h, 0.01 * h)                                     # LeakyReLU

    # Layer 3: (8, 256) @ (256, tb); out features zero-padded 4 -> 8 rows.
    h = jnp.dot(w3_ref[...], h.astype(w3_ref.dtype),
                preferred_element_type=jnp.float32) + b3_ref[...]    # (8, tb)

    # exp output transform; lane-dense (8, tb) store (batch on lanes).
    oT_ref[...] = jnp.exp(h)


def project_agent_forward(obs, params, *, block_b=2048, use_bf16=True):
    """obs: (B, 6) float32 (strictly positive). Returns (B, 4) float32."""
    w1, b1 = params["w1"], params["b1"]   # (256, 6), (256,)
    w2, b2 = params["w2"], params["b2"]   # (256, 256), (256,)
    w3, b3 = params["w3"], params["b3"]   # (4, 256), (4,)

    B, f_in = obs.shape
    hidden = w1.shape[0]
    f_out = w3.shape[0]

    # Pad weights/biases to aligned shapes (zero rows/cols -> exp(0)=1 columns
    # and zero contributions, all sliced off / no-ops).
    w1p = jnp.zeros((hidden, K_PAD), w1.dtype).at[:, :f_in].set(w1)
    w3p = jnp.zeros((OUT_PAD, hidden), w3.dtype).at[:f_out, :].set(w3)
    b1c = b1.reshape(hidden, 1)
    b2c = b2.reshape(hidden, 1)
    b3c = jnp.zeros((OUT_PAD, 1), b3.dtype).at[:f_out, 0].set(b3)

    # bf16 MXU operands (default); accumulation stays f32 inside the kernel.
    mxu_dtype = jnp.bfloat16 if use_bf16 else w2.dtype
    w1p = w1p.astype(mxu_dtype)
    w2m = w2.astype(mxu_dtype)
    w3p = w3p.astype(mxu_dtype)

    # Batch tiling: lane-aligned tiles; force an even step count when B > 128
    # so the parallel batch axis splits evenly across v7x's 2 TensorCores.
    steps = _cdiv(B, block_b)
    if B > 128:
        steps = max(steps, 2)
        if steps % 2:
            steps += 1
    tb = _round_up(_cdiv(B, steps), 128)
    Bp = tb * steps

    # Pad rows/cols with 1.0 (log10(1)=0) and go feature-major: (K_PAD, Bp).
    obs_T = jnp.pad(obs, ((0, Bp - B), (0, K_PAD - f_in)),
                    constant_values=1.0).T

    const_map = lambda i: (0, 0)
    weight_bytes = sum(int(a.size) * a.dtype.itemsize
                       for a in (w1p, b1c, w2m, b2c, w3p, b3c))
    cost = pl.CostEstimate(
        flops=2 * Bp * (K_PAD * hidden + hidden * hidden + hidden * OUT_PAD),
        transcendentals=Bp * (K_PAD + OUT_PAD),
        bytes_accessed=Bp * K_PAD * 4 + Bp * OUT_PAD * 4 + weight_bytes,
    )

    outT = pl.pallas_call(
        mlp_kernel,
        out_shape=jax.ShapeDtypeStruct((OUT_PAD, Bp), jnp.float32),
        grid=(steps,),
        in_specs=[
            pl.BlockSpec((K_PAD, tb), lambda i: (0, i)),     # obs tile (streams)
            pl.BlockSpec((hidden, K_PAD), const_map),        # w1 (resident)
            pl.BlockSpec((hidden, 1), const_map),            # b1
            pl.BlockSpec((hidden, hidden), const_map),       # w2
            pl.BlockSpec((hidden, 1), const_map),            # b2
            pl.BlockSpec((OUT_PAD, hidden), const_map),      # w3 (padded)
            pl.BlockSpec((OUT_PAD, 1), const_map),           # b3 (padded)
        ],
        out_specs=pl.BlockSpec((OUT_PAD, tb), lambda i: (0, i)),
        compiler_params=pltpu.CompilerParams(
            dimension_semantics=("parallel",),               # megacore on v7x
            vmem_limit_bytes=32 * 1024 * 1024,
        ),
        cost_estimate=cost,
    )(obs_T, w1p, b1c, w2m, b2c, w3p, b3c)

    return outT[:f_out, :B].T


def init_params(key):
    """Deterministic init matching nn.Linear (uniform +/- 1/sqrt(fan_in)).
    Weights stored in PyTorch layout: w (out, in), b (out,)."""
    ks = jax.random.split(key, 6)

    def lin(kw, kb, fan_in, fan_out):
        bound = 1.0 / jnp.sqrt(jnp.float32(fan_in))
        w = jax.random.uniform(kw, (fan_out, fan_in), jnp.float32, -bound, bound)
        b = jax.random.uniform(kb, (fan_out,), jnp.float32, -bound, bound)
        return w, b

    w1, b1 = lin(ks[0], ks[1], 6, 256)
    w2, b2 = lin(ks[2], ks[3], 256, 256)
    w3, b3 = lin(ks[4], ks[5], 256, 4)
    return {"w1": w1, "b1": b1, "w2": w2, "b2": b2, "w3": w3, "b3": b3}


def reference_forward(obs, params):
    """Pure-JAX reference for validation (batch-major, PyTorch-layout weights)."""
    x = jnp.log10(obs)
    x = x @ params["w1"].T + params["b1"]
    x = jnp.maximum(x, 0.01 * x)
    x = x @ params["w2"].T + params["b2"]
    x = jnp.maximum(x, 0.01 * x)
    x = x @ params["w3"].T + params["b3"]
    return jnp.exp(x)


if __name__ == "__main__":
    key = jax.random.PRNGKey(0)
    k_obs, k_params = jax.random.split(key)
    params = init_params(k_params)

    # Small batch (per-RL-step usage). Observations must be strictly positive.
    B = 8
    obs = jax.random.uniform(k_obs, (B, 6), jnp.float32, minval=0.1, maxval=10.0)
    ref = jax.block_until_ready(reference_forward(obs, params))

    # f32 path: near bit-exact check.
    out_f32 = jax.block_until_ready(
        project_agent_forward(obs, params, use_bf16=False))
    assert out_f32.shape == (B, 4), out_f32.shape
    assert jnp.allclose(out_f32, ref, rtol=1e-4, atol=1e-5)

    # Default (bf16 MXU operands, f32 accumulation): relaxed tolerance.
    out_bf16 = jax.block_until_ready(project_agent_forward(obs, params))
    assert out_bf16.shape == (B, 4), out_bf16.shape
    assert jnp.allclose(out_bf16, ref, rtol=1e-1, atol=1e-2)

    # Larger, non-multiple-of-tile batch: exercises padding + an even-step grid
    # (tb=640, grid=(2,)) with weights held VMEM-resident across steps.
    B2 = 1200
    obs2 = jax.random.uniform(jax.random.PRNGKey(1), (B2, 6), jnp.float32,
                              minval=0.1, maxval=10.0)
    ref2 = jax.block_until_ready(reference_forward(obs2, params))

    out2 = jax.block_until_ready(project_agent_forward(obs2, params))
    assert out2.shape == (B2, 4), out2.shape
    assert jnp.allclose(out2, ref2, rtol=1e-1, atol=1e-2)

    out2_f32 = jax.block_until_ready(
        project_agent_forward(obs2, params, use_bf16=False))
    assert out2_f32.shape == (B2, 4), out2_f32.shape
    assert jnp.allclose(out2_f32, ref2, rtol=1e-4, atol=1e-5)

    print("KERNEL_OK")
</pallas_src>

<mosaic_0001>
module attributes {stable_mosaic.version = 11 : i64} {
  func.func @mlp_kernel(%arg0: i32, %arg1: memref<8x128xf32, #tpu.memory_space<vmem>>, %arg2: memref<256x8xf32, #tpu.memory_space<vmem>>, %arg3: memref<256x1xf32, #tpu.memory_space<vmem>>, %arg4: memref<256x256xf32, #tpu.memory_space<vmem>>, %arg5: memref<256x1xf32, #tpu.memory_space<vmem>>, %arg6: memref<8x256xf32, #tpu.memory_space<vmem>>, %arg7: memref<8x1xf32, #tpu.memory_space<vmem>>, %arg8: memref<8x128xf32, #tpu.memory_space<vmem>>) attributes {dimension_semantics = [#tpu.dimension_semantics<parallel>], iteration_bounds = array<i64: 1>, scalar_prefetch = 0 : i64, scratch_operands = 0 : i64, tpu.core_type = #tpu.core_type<tc>, window_params = [{transform_indices = @transform_0, window_bounds = array<i64: 8, 128>}, {pipeline_mode = #tpu.pipeline_mode<synchronous>, transform_indices = @transform_1, window_bounds = array<i64: 256, 8>}, {pipeline_mode = #tpu.pipeline_mode<synchronous>, transform_indices = @transform_2, window_bounds = array<i64: 256, 1>}, {pipeline_mode = #tpu.pipeline_mode<synchronous>, transform_indices = @transform_3, window_bounds = array<i64: 256, 256>}, {pipeline_mode = #tpu.pipeline_mode<synchronous>, transform_indices = @transform_4, window_bounds = array<i64: 256, 1>}, {pipeline_mode = #tpu.pipeline_mode<synchronous>, transform_indices = @transform_5, window_bounds = array<i64: 8, 256>}, {pipeline_mode = #tpu.pipeline_mode<synchronous>, transform_indices = @transform_6, window_bounds = array<i64: 8, 1>}, {transform_indices = @transform_7, window_bounds = array<i64: 8, 128>}]} {
    %c0 = arith.constant 0 : index
    %c0_0 = arith.constant 0 : index
    %0 = vector.load %arg1[%c0, %c0_0] : memref<8x128xf32, #tpu.memory_space<vmem>>, vector<8x128xf32>
    %1 = math.log %0 : vector<8x128xf32>
    %cst = arith.constant 0.434294492 : f32
    %2 = vector.broadcast %cst : f32 to vector<8x128xf32>
    %3 = arith.mulf %1, %2 : vector<8x128xf32>
    %c0_1 = arith.constant 0 : index
    %c0_2 = arith.constant 0 : index
    %4 = vector.load %arg2[%c0_1, %c0_2] : memref<256x8xf32, #tpu.memory_space<vmem>>, vector<256x8xf32>
    %cst_3 = arith.constant dense<0.000000e+00> : vector<256x128xf32>
    %5 = tpu.matmul %4, %3, %cst_3 {dimension_numbers = #tpu.dot_dimension_numbers<[1], [0], [0], [1], [0, 0, 1, 1], [], []>} : vector<256x8xf32>, vector<8x128xf32>, vector<256x128xf32> -> vector<256x128xf32>
    %c0_4 = arith.constant 0 : index
    %c0_5 = arith.constant 0 : index
    %6 = vector.load %arg3[%c0_4, %c0_5] : memref<256x1xf32, #tpu.memory_space<vmem>>, vector<256x1xf32>
    %7 = vector.broadcast %6 : vector<256x1xf32> to vector<256x128xf32>
    %8 = arith.addf %5, %7 : vector<256x128xf32>
    %cst_6 = arith.constant 0.00999999977 : f32
    %9 = vector.broadcast %cst_6 : f32 to vector<256x128xf32>
    %10 = arith.mulf %9, %8 : vector<256x128xf32>
    %11 = arith.maximumf %8, %10 : vector<256x128xf32>
    %c0_7 = arith.constant 0 : index
    %c0_8 = arith.constant 0 : index
    %12 = vector.load %arg4[%c0_7, %c0_8] : memref<256x256xf32, #tpu.memory_space<vmem>>, vector<256x256xf32>
    %cst_9 = arith.constant dense<0.000000e+00> : vector<256x128xf32>
    %13 = tpu.matmul %12, %11, %cst_9 {dimension_numbers = #tpu.dot_dimension_numbers<[1], [0], [0], [1], [0, 0, 1, 1], [], []>} : vector<256x256xf32>, vector<256x128xf32>, vector<256x128xf32> -> vector<256x128xf32>
    %c0_10 = arith.constant 0 : index
    %c0_11 = arith.constant 0 : index
    %14 = vector.load %arg5[%c0_10, %c0_11] : memref<256x1xf32, #tpu.memory_space<vmem>>, vector<256x1xf32>
    %15 = vector.broadcast %14 : vector<256x1xf32> to vector<256x128xf32>
    %16 = arith.addf %13, %15 : vector<256x128xf32>
    %cst_12 = arith.constant 0.00999999977 : f32
    %17 = vector.broadcast %cst_12 : f32 to vector<256x128xf32>
    %18 = arith.mulf %17, %16 : vector<256x128xf32>
    %19 = arith.maximumf %16, %18 : vector<256x128xf32>
    %c0_13 = arith.constant 0 : index
    %c0_14 = arith.constant 0 : index
    %20 = vector.load %arg6[%c0_13, %c0_14] : memref<8x256xf32, #tpu.memory_space<vmem>>, vector<8x256xf32>
    %cst_15 = arith.constant dense<0.000000e+00> : vector<8x128xf32>
    %21 = tpu.matmul %20, %19, %cst_15 {dimension_numbers = #tpu.dot_dimension_numbers<[1], [0], [0], [1], [0, 0, 1, 1], [], []>} : vector<8x256xf32>, vector<256x128xf32>, vector<8x128xf32> -> vector<8x128xf32>
    %c0_16 = arith.constant 0 : index
    %c0_17 = arith.constant 0 : index
    %22 = vector.load %arg7[%c0_16, %c0_17] : memref<8x1xf32, #tpu.memory_space<vmem>>, vector<8x1xf32>
    %23 = vector.broadcast %22 : vector<8x1xf32> to vector<8x128xf32>
    %24 = arith.addf %21, %23 : vector<8x128xf32>
    %25 = math.exp %24 : vector<8x128xf32>
    %c0_18 = arith.constant 0 : index
    %c0_19 = arith.constant 0 : index
    %26 = vector.load %arg8[%c0_18, %c0_19] : memref<8x128xf32, #tpu.memory_space<vmem>>, vector<8x128xf32>
    tpu.vector_store %arg8[%c0_18, %c0_19], %25 {strides = array<i32>} : memref<8x128xf32, #tpu.memory_space<vmem>>, vector<8x128xf32>,
    return
  }
  func.func @transform_0(%arg0: i32) -> (i32, i32) {
    %c0_i32 = arith.constant 0 : i32
    %c0_i32_0 = arith.constant 0 : i32
    return %c0_i32, %arg0 : i32, i32
  }
  func.func @transform_1(%arg0: i32) -> (i32, i32) {
    %c0_i32 = arith.constant 0 : i32
    %c0_i32_0 = arith.constant 0 : i32
    %c0_i32_1 = arith.constant 0 : i32
    return %c0_i32, %c0_i32_0 : i32, i32
  }
  func.func @transform_2(%arg0: i32) -> (i32, i32) {
    %c0_i32 = arith.constant 0 : i32
    %c0_i32_0 = arith.constant 0 : i32
    %c0_i32_1 = arith.constant 0 : i32
    return %c0_i32, %c0_i32_0 : i32, i32
  }
  func.func @transform_3(%arg0: i32) -> (i32, i32) {
    %c0_i32 = arith.constant 0 : i32
    %c0_i32_0 = arith.constant 0 : i32
    %c0_i32_1 = arith.constant 0 : i32
    return %c0_i32, %c0_i32_0 : i32, i32
  }
  func.func @transform_4(%arg0: i32) -> (i32, i32) {
    %c0_i32 = arith.constant 0 : i32
    %c0_i32_0 = arith.constant 0 : i32
    %c0_i32_1 = arith.constant 0 : i32
    return %c0_i32, %c0_i32_0 : i32, i32
  }
  func.func @transform_5(%arg0: i32) -> (i32, i32) {
    %c0_i32 = arith.constant 0 : i32
    %c0_i32_0 = arith.constant 0 : i32
    %c0_i32_1 = arith.constant 0 : i32
    return %c0_i32, %c0_i32_0 : i32, i32
  }
  func.func @transform_6(%arg0: i32) -> (i32, i32) {
    %c0_i32 = arith.constant 0 : i32
    %c0_i32_0 = arith.constant 0 : i32
    %c0_i32_1 = arith.constant 0 : i32
    return %c0_i32, %c0_i32_0 : i32, i32
  }
  func.func @transform_7(%arg0: i32) -> (i32, i32) {
    %c0_i32 = arith.constant 0 : i32
    %c0_i32_0 = arith.constant 0 : i32
    return %c0_i32, %arg0 : i32, i32
  }
}

</mosaic_0001>

<llo_original>
// kernel: tpu_custom_call.1
$region0: #{tpu_custom_call.1}
  #allocation0 [shape = 'u32[]', space=smem, size = 0x4, offset = 0x4, fixed_abs, tag = 'smem constant byte address 0x4 - core index']
  #allocation1 [shape = 'u32[144,128]{1,0:T(1,128)}', space=vmem, size = 0x12000, scoped, tag = 'internal scratch']
  %s0 = inlined_call_operand.vmem [shape: f32[8,128], index: 0, kind: input, shape index: {}]
  %s1 = inlined_call_operand.vmem [shape: f32[256,8], index: 1, kind: input, shape index: {}]
  %s2 = inlined_call_operand.vmem [shape: f32[256,1], index: 2, kind: input, shape index: {}]
  %s3 = inlined_call_operand.vmem [shape: f32[256,256], index: 3, kind: input, shape index: {}]
  %s4 = inlined_call_operand.vmem [shape: f32[256,1], index: 4, kind: input, shape index: {}]
  %s5 = inlined_call_operand.vmem [shape: f32[8,256], index: 5, kind: input, shape index: {}]
  %s6 = inlined_call_operand.vmem [shape: f32[8,1], index: 6, kind: input, shape index: {}]
  %s7 = inlined_call_operand.hbm [shape: f32[8,128], index: 7, kind: output, shape index: {}]
  %s8 = sld [smem:[#allocation0]]
  $region38: #{tpu_custom_call.1} parent=0
    _
  %s10 = ssub.s32 1, %s8
  %s11 = scalar_select 0, %s10, %s8
  $region1: #{tpu_custom_call.1} parent=0
    #allocation2 [shape = 'u8[4096]{0}', space=vmem, size = 0x1000, scoped, tag = 'output window, operand 0, single buffered']
    #allocation3 [shape = 's32[1]{0}', space=sflag, size = 0x4, scoped, tag = 'scoped memory for tpu_custom_call.1']
    %12 = vsyncpa [#allocation3], 0
    // Predicated region
    $region2: #{tpu_custom_call.1} parent=1 // pred_check
      _
    $region3: #{tpu_custom_call.1} parent=1 // pred_check_branch
      %14 = sbr.rel (0) target = $region5
    $region4: #{tpu_custom_call.1} parent=1 // pred_region
      _
    $region5: #{tpu_custom_call.1} parent=1 // pred_fallthru
      _
    // Predicated region
    $region6: #{tpu_custom_call.1} parent=1 // pred_check
      _
    $region7: #{tpu_custom_call.1} parent=1 // pred_check_branch
      %16 = sbr.rel (0) target = $region9
    $region8: #{tpu_custom_call.1} parent=1 // pred_region
      _
    $region9: #{tpu_custom_call.1} parent=1 // pred_fallthru
      _
    // Predicated region
    $region10: #{tpu_custom_call.1} parent=1 // pred_check
      _
    $region11: #{tpu_custom_call.1} parent=1 // pred_check_branch
      %18 = sbr.rel (0) target = $region13
    $region12: #{tpu_custom_call.1} parent=1 // pred_region
      _
    $region13: #{tpu_custom_call.1} parent=1 // pred_fallthru
      _
    // Predicated region
    $region14: #{tpu_custom_call.1} parent=1 // pred_check
      _
    $region15: #{tpu_custom_call.1} parent=1 // pred_check_branch
      %20 = sbr.rel (0) target = $region17
    $region16: #{tpu_custom_call.1} parent=1 // pred_region
      _
    $region17: #{tpu_custom_call.1} parent=1 // pred_fallthru
      _
    // Predicated region
    $region18: #{tpu_custom_call.1} parent=1 // pred_check
      _
    $region19: #{tpu_custom_call.1} parent=1 // pred_check_branch
      %22 = sbr.rel (0) target = $region21
    $region20: #{tpu_custom_call.1} parent=1 // pred_region
      _
    $region21: #{tpu_custom_call.1} parent=1 // pred_fallthru
      _
    // Predicated region
    $region22: #{tpu_custom_call.1} parent=1 // pred_check
      _
    $region23: #{tpu_custom_call.1} parent=1 // pred_check_branch
      %24 = sbr.rel (0) target = $region25
    $region24: #{tpu_custom_call.1} parent=1 // pred_region
      _
    $region25: #{tpu_custom_call.1} parent=1 // pred_fallthru
      _
    // Predicated region
    $region26: #{tpu_custom_call.1} parent=1 // pred_check
      _
    $region27: #{tpu_custom_call.1} parent=1 // pred_check_branch
      %26 = sbr.rel (0) target = $region29
    $region28: #{tpu_custom_call.1} parent=1 // pred_region
      _
    $region29: #{tpu_custom_call.1} parent=1 // pred_fallthru
      _
    %v27 = vld [vmem:[%s0] sm:$0xff]
    %v28 = vlog2.pop %v27
    %v29 = vmul.f32 %v28, 0.6931472
    %v30 = vmul.f32 %v29, 0.4342945
    %v31 = vld [vmem:[%s1] sm:$0xff]
    %v32 = vld [vmem:[%s1 + $0x8] sm:$0xff]
    %v33 = vld [vmem:[%s1 + $0x10] sm:$0xff]
    %v34 = vld [vmem:[%s1 + $0x18] sm:$0xff]
    %v35 = vld [vmem:[%s1 + $0x20] sm:$0xff]
    %v36 = vld [vmem:[%s1 + $0x28] sm:$0xff]
    %v37 = vld [vmem:[%s1 + $0x30] sm:$0xff]
    %v38 = vld [vmem:[%s1 + $0x38] sm:$0xff]
    %v39 = vld [vmem:[%s1 + $0x40] sm:$0xff]
    %v40 = vld [vmem:[%s1 + $0x48] sm:$0xff]
    %v41 = vld [vmem:[%s1 + $0x50] sm:$0xff]
    %v42 = vld [vmem:[%s1 + $0x58] sm:$0xff]
    %v43 = vld [vmem:[%s1 + $0x60] sm:$0xff]
    %v44 = vld [vmem:[%s1 + $0x68] sm:$0xff]
    %v45 = vld [vmem:[%s1 + $0x70] sm:$0xff]
    %v46 = vld [vmem:[%s1 + $0x78] sm:$0xff]
    %v47 = vld [vmem:[%s1 + $0x80] sm:$0xff]
    %v48 = vld [vmem:[%s1 + $0x88] sm:$0xff]
    %v49 = vld [vmem:[%s1 + $0x90] sm:$0xff]
    %v50 = vld [vmem:[%s1 + $0x98] sm:$0xff]
    %v51 = vld [vmem:[%s1 + $0xa0] sm:$0xff]
    %v52 = vld [vmem:[%s1 + $0xa8] sm:$0xff]
    %v53 = vld [vmem:[%s1 + $0xb0] sm:$0xff]
    %v54 = vld [vmem:[%s1 + $0xb8] sm:$0xff]
    %v55 = vld [vmem:[%s1 + $0xc0] sm:$0xff]
    %v56 = vld [vmem:[%s1 + $0xc8] sm:$0xff]
    %v57 = vld [vmem:[%s1 + $0xd0] sm:$0xff]
    %v58 = vld [vmem:[%s1 + $0xd8] sm:$0xff]
    %v59 = vld [vmem:[%s1 + $0xe0] sm:$0xff]
    %v60 = vld [vmem:[%s1 + $0xe8] sm:$0xff]
    %v61 = vld [vmem:[%s1 + $0xf0] sm:$0xff]
    %v62 = vld [vmem:[%s1 + $0xf8] sm:$0xff]
    %v63 = vld [vmem:[%s2] sm:$0xff]
    %v64 = vld [vmem:[%s2 + $0x8] sm:$0xff]
    %v65 = vld [vmem:[%s2 + $0x10] sm:$0xff]
    %v66 = vld [vmem:[%s2 + $0x18] sm:$0xff]
    %v67 = vld [vmem:[%s2 + $0x20] sm:$0xff]
    %v68 = vld [vmem:[%s2 + $0x28] sm:$0xff]
    %v69 = vld [vmem:[%s2 + $0x30] sm:$0xff]
    %v70 = vld [vmem:[%s2 + $0x38] sm:$0xff]
    %v71 = vld [vmem:[%s2 + $0x40] sm:$0xff]
    %v72 = vld [vmem:[%s2 + $0x48] sm:$0xff]
    %v73 = vld [vmem:[%s2 + $0x50] sm:$0xff]
    %v74 = vld [vmem:[%s2 + $0x58] sm:$0xff]
    %v75 = vld [vmem:[%s2 + $0x60] sm:$0xff]
    %v76 = vld [vmem:[%s2 + $0x68] sm:$0xff]
    %v77 = vld [vmem:[%s2 + $0x70] sm:$0xff]
    %v78 = vld [vmem:[%s2 + $0x78] sm:$0xff]
    %v79 = vld [vmem:[%s2 + $0x80] sm:$0xff]
    %v80 = vld [vmem:[%s2 + $0x88] sm:$0xff]
    %v81 = vld [vmem:[%s2 + $0x90] sm:$0xff]
    %v82 = vld [vmem:[%s2 + $0x98] sm:$0xff]
    %v83 = vld [vmem:[%s2 + $0xa0] sm:$0xff]
    %v84 = vld [vmem:[%s2 + $0xa8] sm:$0xff]
    %v85 = vld [vmem:[%s2 + $0xb0] sm:$0xff]
    %v86 = vld [vmem:[%s2 + $0xb8] sm:$0xff]
    %v87 = vld [vmem:[%s2 + $0xc0] sm:$0xff]
    %v88 = vld [vmem:[%s2 + $0xc8] sm:$0xff]
    %v89 = vld [vmem:[%s2 + $0xd0] sm:$0xff]
    %v90 = vld [vmem:[%s2 + $0xd8] sm:$0xff]
    %v91 = vld [vmem:[%s2 + $0xe0] sm:$0xff]
    %v92 = vld [vmem:[%s2 + $0xe8] sm:$0xff]
    %v93 = vld [vmem:[%s2 + $0xf0] sm:$0xff]
    %v94 = vld [vmem:[%s2 + $0xf8] sm:$0xff]
    %96 = vset.pattern.permute.xlu0 0
    %97 = vperm.xlu0 %96, %v63
    %v98 = vpop.permute.xlu0 %97
    %101 = vset.pattern.permute.xlu0 0
    %102 = vperm.xlu0 %101, %v64
    %v103 = vpop.permute.xlu0 %102
    %106 = vset.pattern.permute.xlu0 0
    %107 = vperm.xlu0 %106, %v65
    %v108 = vpop.permute.xlu0 %107
    %111 = vset.pattern.permute.xlu0 0
    %112 = vperm.xlu0 %111, %v66
    %v113 = vpop.permute.xlu0 %112
    %116 = vset.pattern.permute.xlu0 0
    %117 = vperm.xlu0 %116, %v67
    %v118 = vpop.permute.xlu0 %117
    %121 = vset.pattern.permute.xlu0 0
    %122 = vperm.xlu0 %121, %v68
    %v123 = vpop.permute.xlu0 %122
    %126 = vset.pattern.permute.xlu0 0
    %127 = vperm.xlu0 %126, %v69
    %v128 = vpop.permute.xlu0 %127
    %131 = vset.pattern.permute.xlu0 0
    %132 = vperm.xlu0 %131, %v70
    %v133 = vpop.permute.xlu0 %132
    %136 = vset.pattern.permute.xlu0 0
    %137 = vperm.xlu0 %136, %v71
    %v138 = vpop.permute.xlu0 %137
    %141 = vset.pattern.permute.xlu0 0
    %142 = vperm.xlu0 %141, %v72
    %v143 = vpop.permute.xlu0 %142
    %146 = vset.pattern.permute.xlu0 0
    %147 = vperm.xlu0 %146, %v73
    %v148 = vpop.permute.xlu0 %147
    %151 = vset.pattern.permute.xlu0 0
    %152 = vperm.xlu0 %151, %v74
    %v153 = vpop.permute.xlu0 %152
    %156 = vset.pattern.permute.xlu0 0
    %157 = vperm.xlu0 %156, %v75
    %v158 = vpop.permute.xlu0 %157
    %161 = vset.pattern.permute.xlu0 0
    %162 = vperm.xlu0 %161, %v76
    %v163 = vpop.permute.xlu0 %162
    %166 = vset.pattern.permute.xlu0 0
    %167 = vperm.xlu0 %166, %v77
    %v168 = vpop.permute.xlu0 %167
    %171 = vset.pattern.permute.xlu0 0
    %172 = vperm.xlu0 %171, %v78
    %v173 = vpop.permute.xlu0 %172
    %176 = vset.pattern.permute.xlu0 0
    %177 = vperm.xlu0 %176, %v79
    %v178 = vpop.permute.xlu0 %177
    %181 = vset.pattern.permute.xlu0 0
    %182 = vperm.xlu0 %181, %v80
    %v183 = vpop.permute.xlu0 %182
    %186 = vset.pattern.permute.xlu0 0
    %187 = vperm.xlu0 %186, %v81
    %v188 = vpop.permute.xlu0 %187
    %191 = vset.pattern.permute.xlu0 0
    %192 = vperm.xlu0 %191, %v82
    %v193 = vpop.permute.xlu0 %192
    %196 = vset.pattern.permute.xlu0 0
    %197 = vperm.xlu0 %196, %v83
    %v198 = vpop.permute.xlu0 %197
    %201 = vset.pattern.permute.xlu0 0
    %202 = vperm.xlu0 %201, %v84
    %v203 = vpop.permute.xlu0 %202
    %206 = vset.pattern.permute.xlu0 0
    %207 = vperm.xlu0 %206, %v85
    %v208 = vpop.permute.xlu0 %207
    %211 = vset.pattern.permute.xlu0 0
    %212 = vperm.xlu0 %211, %v86
    %v213 = vpop.permute.xlu0 %212
    %216 = vset.pattern.permute.xlu0 0
    %217 = vperm.xlu0 %216, %v87
    %v218 = vpop.permute.xlu0 %217
    %221 = vset.pattern.permute.xlu0 0
    %222 = vperm.xlu0 %221, %v88
    %v223 = vpop.permute.xlu0 %222
    %226 = vset.pattern.permute.xlu0 0
    %227 = vperm.xlu0 %226, %v89
    %v228 = vpop.permute.xlu0 %227
    %231 = vset.pattern.permute.xlu0 0
    %232 = vperm.xlu0 %231, %v90
    %v233 = vpop.permute.xlu0 %232
    %236 = vset.pattern.permute.xlu0 0
    %237 = vperm.xlu0 %236, %v91
    %v238 = vpop.permute.xlu0 %237
    %241 = vset.pattern.permute.xlu0 0
    %242 = vperm.xlu0 %241, %v92
    %v243 = vpop.permute.xlu0 %242
    %246 = vset.pattern.permute.xlu0 0
    %247 = vperm.xlu0 %246, %v93
    %v248 = vpop.permute.xlu0 %247
    %251 = vset.pattern.permute.xlu0 0
    %252 = vperm.xlu0 %251, %v94
    %v253 = vpop.permute.xlu0 %252
    %vm255 = vcmask 64512
    %v257 = vsel %vm255, %v31, 0
    %v260 = vsel %vm255, %v32, 0
    %v263 = vsel %vm255, %v33, 0
    %v266 = vsel %vm255, %v34, 0
    %v269 = vsel %vm255, %v35, 0
    %v272 = vsel %vm255, %v36, 0
    %v275 = vsel %vm255, %v37, 0
    %v278 = vsel %vm255, %v38, 0
    %v281 = vsel %vm255, %v39, 0
    %v284 = vsel %vm255, %v40, 0
    %v287 = vsel %vm255, %v41, 0
    %v290 = vsel %vm255, %v42, 0
    %v293 = vsel %vm255, %v43, 0
    %v296 = vsel %vm255, %v44, 0
    %v299 = vsel %vm255, %v45, 0
    %v302 = vsel %vm255, %v46, 0
    %v305 = vsel %vm255, %v47, 0
    %v308 = vsel %vm255, %v48, 0
    %v311 = vsel %vm255, %v49, 0
    %v314 = vsel %vm255, %v50, 0
    %v317 = vsel %vm255, %v51, 0
    %v320 = vsel %vm255, %v52, 0
    %v323 = vsel %vm255, %v53, 0
    %v326 = vsel %vm255, %v54, 0
    %v329 = vsel %vm255, %v55, 0
    %v332 = vsel %vm255, %v56, 0
    %v335 = vsel %vm255, %v57, 0
    %v338 = vsel %vm255, %v58, 0
    %v341 = vsel %vm255, %v59, 0
    %v344 = vsel %vm255, %v60, 0
    %v347 = vsel %vm255, %v61, 0
    %v350 = vsel %vm255, %v62, 0
    %352 = vmatprep.subr.mxu0 0.0
    %353 = vmatpush1.msra.mxu0 %v30
    %354 = vmatprep.subr.mxu0 0.0
    %355 = vmatpush1.msra.mxu0 0.0
    %356 = vmatprep.subr.mxu0 0.0
    %357 = vmatpush1.msra.mxu0 0.0
    %358 = vmatprep.subr.mxu0 0.0
    %359 = vmatpush1.msra.mxu0 0.0
    %360 = vmatprep.subr.mxu0 0.0
    %361 = vmatpush1.msra.mxu0 0.0
    %362 = vmatprep.subr.mxu0 0.0
    %363 = vmatpush1.msra.mxu0 0.0
    %364 = vmatprep.subr.mxu0 0.0
    %365 = vmatpush1.msra.mxu0 0.0
    %366 = vmatprep.subr.mxu0 0.0
    %367 = vmatpush1.msra.mxu0 0.0
    %368 = vmatprep.subr.mxu0 0.0
    %369 = vmatpush1.msra.mxu0 0.0
    %370 = vmatprep.subr.mxu0 0.0
    %371 = vmatpush1.msra.mxu0 0.0
    %372 = vmatprep.subr.mxu0 0.0
    %373 = vmatpush1.msra.mxu0 0.0
    %374 = vmatprep.subr.mxu0 0.0
    %375 = vmatpush1.msra.mxu0 0.0
    %376 = vmatprep.subr.mxu0 0.0
    %377 = vmatpush1.msra.mxu0 0.0
    %378 = vmatprep.subr.mxu0 0.0
    %379 = vmatpush1.msra.mxu0 0.0
    %380 = vmatprep.subr.mxu0 0.0
    %381 = vmatpush1.msra.mxu0 0.0
    %382 = vmatprep.subr.mxu0 0.0
    %383 = vmatpush1.msra.mxu0 0.0
    %384 = vmatprep.subr.mxu0 0.0
    %385 = vmatpush1.msra.mxu0 0.0
    %386 = vmatprep.subr.mxu0 0.0
    %387 = vmatpush1.msra.mxu0 0.0
    %388 = vmatprep.subr.mxu0 0.0
    %389 = vmatpush1.msra.mxu0 0.0
    %390 = vmatprep.subr.mxu0 0.0
    %391 = vmatpush1.msra.mxu0 0.0
    %392 = vmatprep.subr.mxu0 0.0
    %393 = vmatpush1.msra.mxu0 0.0
    %394 = vmatprep.subr.mxu0 0.0
    %395 = vmatpush1.msra.mxu0 0.0
    %396 = vmatprep.subr.mxu0 0.0
    %397 = vmatpush1.msra.mxu0 0.0
    %398 = vmatprep.subr.mxu0 0.0
    %399 = vmatpush1.msra.mxu0 0.0
    %400 = vmatprep.subr.mxu0 0.0
    %401 = vmatpush1.msra.mxu0 0.0
    %402 = vmatprep.subr.mxu0 0.0
    %403 = vmatpush1.msra.mxu0 0.0
    %404 = vmatprep.subr.mxu0 0.0
    %405 = vmatpush1.msra.mxu0 0.0
    %406 = vmatprep.subr.mxu0 0.0
    %407 = vmatpush1.msra.mxu0 0.0
    %408 = vmatprep.subr.mxu0 0.0
    %409 = vmatpush1.msra.mxu0 0.0
    %410 = vmatprep.subr.mxu0 0.0
    %411 = vmatpush1.msra.mxu0 0.0
    %412 = vmatprep.subr.mxu0 0.0
    %413 = vmatpush1.msra.mxu0 0.0
    %414 = vmatprep.subr.mxu0 0.0
    %415 = vmatpush1.msra.mxu0 0.0
    %416 = vmatprep.mubr.f32.mxu0 0.0
    %417 = vmatmul.mubr.f32.gmra.mrb[0].mxu0 %v257
    %v418 = vpop.f32.mrb[0].mxu0
    %v419 = vadd.f32 %v98, %v418
    %v420 = vpop.f32.mrb[0].mxu0
    %421 = vmatprep.mubr.f32.mxu0 0.0
    %422 = vmatmul.mubr.f32.gmra.mrb[0].mxu0 %v260
    %v423 = vpop.f32.mrb[0].mxu0
    %v424 = vadd.f32 %v103, %v423
    %v425 = vpop.f32.mrb[0].mxu0
    %426 = vmatprep.mubr.f32.mxu0 0.0
    %427 = vmatmul.mubr.f32.gmra.mrb[0].mxu0 %v263
    %v428 = vpop.f32.mrb[0].mxu0
    %v429 = vadd.f32 %v108, %v428
    %v430 = vpop.f32.mrb[0].mxu0
    %431 = vmatprep.mubr.f32.mxu0 0.0
    %432 = vmatmul.mubr.f32.gmra.mrb[0].mxu0 %v266
    %v433 = vpop.f32.mrb[0].mxu0
    %v434 = vadd.f32 %v113, %v433
    %v435 = vpop.f32.mrb[0].mxu0
    %436 = vmatprep.mubr.f32.mxu0 0.0
    %437 = vmatmul.mubr.f32.gmra.mrb[0].mxu0 %v269
    %v438 = vpop.f32.mrb[0].mxu0
    %v439 = vadd.f32 %v118, %v438
    %v440 = vpop.f32.mrb[0].mxu0
    %441 = vmatprep.mubr.f32.mxu0 0.0
    %442 = vmatmul.mubr.f32.gmra.mrb[0].mxu0 %v272
    %v443 = vpop.f32.mrb[0].mxu0
    %v444 = vadd.f32 %v123, %v443
    %v445 = vpop.f32.mrb[0].mxu0
    %446 = vmatprep.mubr.f32.mxu0 0.0
    %447 = vmatmul.mubr.f32.gmra.mrb[0].mxu0 %v275
    %v448 = vpop.f32.mrb[0].mxu0
    %v449 = vadd.f32 %v128, %v448
    %v450 = vpop.f32.mrb[0].mxu0
    %451 = vmatprep.mubr.f32.mxu0 0.0
    %452 = vmatmul.mubr.f32.gmra.mrb[0].mxu0 %v278
    %v453 = vpop.f32.mrb[0].mxu0
    %v454 = vadd.f32 %v133, %v453
    %v455 = vpop.f32.mrb[0].mxu0
    %456 = vmatprep.mubr.f32.mxu0 0.0
    %457 = vmatmul.mubr.f32.gmra.mrb[0].mxu0 %v281
    %v458 = vpop.f32.mrb[0].mxu0
    %v459 = vadd.f32 %v138, %v458
    %v460 = vpop.f32.mrb[0].mxu0
    %461 = vmatprep.mubr.f32.mxu0 0.0
    %462 = vmatmul.mubr.f32.gmra.mrb[0].mxu0 %v284
    %v463 = vpop.f32.mrb[0].mxu0
    %v464 = vadd.f32 %v143, %v463
    %v465 = vpop.f32.mrb[0].mxu0
    %466 = vmatprep.mubr.f32.mxu0 0.0
    %467 = vmatmul.mubr.f32.gmra.mrb[0].mxu0 %v287
    %v468 = vpop.f32.mrb[0].mxu0
    %v469 = vadd.f32 %v148, %v468
    %v470 = vpop.f32.mrb[0].mxu0
    %471 = vmatprep.mubr.f32.mxu0 0.0
    %472 = vmatmul.mubr.f32.gmra.mrb[0].mxu0 %v290
    %v473 = vpop.f32.mrb[0].mxu0
    %v474 = vadd.f32 %v153, %v473
    %v475 = vpop.f32.mrb[0].mxu0
    %476 = vmatprep.mubr.f32.mxu0 0.0
    %477 = vmatmul.mubr.f32.gmra.mrb[0].mxu0 %v293
    %v478 = vpop.f32.mrb[0].mxu0
    %v479 = vadd.f32 %v158, %v478
    %v480 = vpop.f32.mrb[0].mxu0
    %481 = vmatprep.mubr.f32.mxu0 0.0
    %482 = vmatmul.mubr.f32.gmra.mrb[0].mxu0 %v296
    %v483 = vpop.f32.mrb[0].mxu0
    %v484 = vadd.f32 %v163, %v483
    %v485 = vpop.f32.mrb[0].mxu0
    %486 = vmatprep.mubr.f32.mxu0 0.0
    %487 = vmatmul.mubr.f32.gmra.mrb[0].mxu0 %v299
    %v488 = vpop.f32.mrb[0].mxu0
    %v489 = vadd.f32 %v168, %v488
    %v490 = vpop.f32.mrb[0].mxu0
    %491 = vmatprep.mubr.f32.mxu0 0.0
    %492 = vmatmul.mubr.f32.gmra.mrb[0].mxu0 %v302
    %v493 = vpop.f32.mrb[0].mxu0
    %v494 = vadd.f32 %v173, %v493
    %v495 = vpop.f32.mrb[0].mxu0
    %496 = vmatprep.mubr.f32.mxu0 0.0
    %497 = vmatmul.mubr.f32.gmra.mrb[0].mxu0 %v305
    %v498 = vpop.f32.mrb[0].mxu0
    %v499 = vadd.f32 %v178, %v498
    %v500 = vpop.f32.mrb[0].mxu0
    %501 = vmatprep.mubr.f32.mxu0 0.0
    %502 = vmatmul.mubr.f32.gmra.mrb[0].mxu0 %v308
    %v503 = vpop.f32.mrb[0].mxu0
    %v504 = vadd.f32 %v183, %v503
    %v505 = vpop.f32.mrb[0].mxu0
    %506 = vmatprep.mubr.f32.mxu0 0.0
    %507 = vmatmul.mubr.f32.gmra.mrb[0].mxu0 %v311
    %v508 = vpop.f32.mrb[0].mxu0
    %v509 = vadd.f32 %v188, %v508
    %v510 = vpop.f32.mrb[0].mxu0
    %511 = vmatprep.mubr.f32.mxu0 0.0
    %512 = vmatmul.mubr.f32.gmra.mrb[0].mxu0 %v314
    %v513 = vpop.f32.mrb[0].mxu0
    %v514 = vadd.f32 %v193, %v513
    %v515 = vpop.f32.mrb[0].mxu0
    %516 = vmatprep.mubr.f32.mxu0 0.0
    %517 = vmatmul.mubr.f32.gmra.mrb[0].mxu0 %v317
    %v518 = vpop.f32.mrb[0].mxu0
    %v519 = vadd.f32 %v198, %v518
    %v520 = vpop.f32.mrb[0].mxu0
    %521 = vmatprep.mubr.f32.mxu0 0.0
    %522 = vmatmul.mubr.f32.gmra.mrb[0].mxu0 %v320
    %v523 = vpop.f32.mrb[0].mxu0
    %v524 = vadd.f32 %v203, %v523
    %v525 = vpop.f32.mrb[0].mxu0
    %526 = vmatprep.mubr.f32.mxu0 0.0
    %527 = vmatmul.mubr.f32.gmra.mrb[0].mxu0 %v323
    %v528 = vpop.f32.mrb[0].mxu0
    %v529 = vadd.f32 %v208, %v528
    %v530 = vpop.f32.mrb[0].mxu0
    %531 = vmatprep.mubr.f32.mxu0 0.0
    %532 = vmatmul.mubr.f32.gmra.mrb[0].mxu0 %v326
    %v533 = vpop.f32.mrb[0].mxu0
    %v534 = vadd.f32 %v213, %v533
    %v535 = vpop.f32.mrb[0].mxu0
    %536 = vmatprep.mubr.f32.mxu0 0.0
    %537 = vmatmul.mubr.f32.gmra.mrb[0].mxu0 %v329
    %v538 = vpop.f32.mrb[0].mxu0
    %v539 = vadd.f32 %v218, %v538
    %v540 = vpop.f32.mrb[0].mxu0
    %541 = vmatprep.mubr.f32.mxu0 0.0
    %542 = vmatmul.mubr.f32.gmra.mrb[0].mxu0 %v332
    %v543 = vpop.f32.mrb[0].mxu0
    %v544 = vadd.f32 %v223, %v543
    %v545 = vpop.f32.mrb[0].mxu0
    %546 = vmatprep.mubr.f32.mxu0 0.0
    %547 = vmatmul.mubr.f32.gmra.mrb[0].mxu0 %v335
    %v548 = vpop.f32.mrb[0].mxu0
    %v549 = vadd.f32 %v228, %v548
    %v550 = vpop.f32.mrb[0].mxu0
    %551 = vmatprep.mubr.f32.mxu0 0.0
    %552 = vmatmul.mubr.f32.gmra.mrb[0].mxu0 %v338
    %v553 = vpop.f32.mrb[0].mxu0
    %v554 = vadd.f32 %v233, %v553
    %v555 = vpop.f32.mrb[0].mxu0
    %556 = vmatprep.mubr.f32.mxu0 0.0
    %557 = vmatmul.mubr.f32.gmra.mrb[0].mxu0 %v341
    %v558 = vpop.f32.mrb[0].mxu0
    %v559 = vadd.f32 %v238, %v558
    %v560 = vpop.f32.mrb[0].mxu0
    %561 = vmatprep.mubr.f32.mxu0 0.0
    %562 = vmatmul.mubr.f32.gmra.mrb[0].mxu0 %v344
    %v563 = vpop.f32.mrb[0].mxu0
    %v564 = vadd.f32 %v243, %v563
    %v565 = vpop.f32.mrb[0].mxu0
    %566 = vmatprep.mubr.f32.mxu0 0.0
    %567 = vmatmul.mubr.f32.gmra.mrb[0].mxu0 %v347
    %v568 = vpop.f32.mrb[0].mxu0
    %v569 = vadd.f32 %v248, %v568
    %v570 = vpop.f32.mrb[0].mxu0
    %571 = vmatprep.mubr.f32.mxu0 0.0
    %572 = vmatmul.mubr.f32.gmra.mrb[0].mxu0 %v350
    %v573 = vpop.f32.mrb[0].mxu0
    %v574 = vadd.f32 %v253, %v573
    %v575 = vpop.f32.mrb[0].mxu0
    %576 = vdwg.mxu0
    %v577 = vmul.f32 %v419, 0.01
    %v578 = vmul.f32 %v424, 0.01
    %v579 = vmul.f32 %v429, 0.01
    %v580 = vmul.f32 %v434, 0.01
    %v581 = vmul.f32 %v439, 0.01
    %v582 = vmul.f32 %v444, 0.01
    %v583 = vmul.f32 %v449, 0.01
    %v584 = vmul.f32 %v454, 0.01
    %v585 = vmul.f32 %v459, 0.01
    %v586 = vmul.f32 %v464, 0.01
    %v587 = vmul.f32 %v469, 0.01
    %v588 = vmul.f32 %v474, 0.01
    %v589 = vmul.f32 %v479, 0.01
    %v590 = vmul.f32 %v484, 0.01
    %v591 = vmul.f32 %v489, 0.01
    %v592 = vmul.f32 %v494, 0.01
    %v593 = vmul.f32 %v499, 0.01
    %v594 = vmul.f32 %v504, 0.01
    %v595 = vmul.f32 %v509, 0.01
    %v596 = vmul.f32 %v514, 0.01
    %v597 = vmul.f32 %v519, 0.01
    %v598 = vmul.f32 %v524, 0.01
    %v599 = vmul.f32 %v529, 0.01
    %v600 = vmul.f32 %v534, 0.01
    %v601 = vmul.f32 %v539, 0.01
    %v602 = vmul.f32 %v544, 0.01
    %v603 = vmul.f32 %v549, 0.01
    %v604 = vmul.f32 %v554, 0.01
    %v605 = vmul.f32 %v559, 0.01
    %v606 = vmul.f32 %v564, 0.01
    %v607 = vmul.f32 %v569, 0.01
    %v608 = vmul.f32 %v574, 0.01
    %v609 = vmax.f32 %v419, %v577
    %v610 = vmax.f32 %v424, %v578
    %v611 = vmax.f32 %v429, %v579
    %v612 = vmax.f32 %v434, %v580
    %v613 = vmax.f32 %v439, %v581
    %v614 = vmax.f32 %v444, %v582
    %v615 = vmax.f32 %v449, %v583
    %v616 = vmax.f32 %v454, %v584
    %v617 = vmax.f32 %v459, %v585
    %v618 = vmax.f32 %v464, %v586
    %v619 = vmax.f32 %v469, %v587
    %v620 = vmax.f32 %v474, %v588
    %v621 = vmax.f32 %v479, %v589
    %v622 = vmax.f32 %v484, %v590
    %v623 = vmax.f32 %v489, %v591
    %v624 = vmax.f32 %v494, %v592
    %v625 = vmax.f32 %v499, %v593
    %v626 = vmax.f32 %v504, %v594
    %v627 = vmax.f32 %v509, %v595
    %v628 = vmax.f32 %v514, %v596
    %v629 = vmax.f32 %v519, %v597
    %v630 = vmax.f32 %v524, %v598
    %v631 = vmax.f32 %v529, %v599
    %v632 = vmax.f32 %v534, %v600
    %v633 = vmax.f32 %v539, %v601
    %v634 = vmax.f32 %v544, %v602
    %v635 = vmax.f32 %v549, %v603
    %v636 = vmax.f32 %v554, %v604
    %v637 = vmax.f32 %v559, %v605
    %v638 = vmax.f32 %v564, %v606
    %v639 = vmax.f32 %v569, %v607
    %v640 = vmax.f32 %v574, %v608
    %v641 = vld [vmem:[%s3] sm:$0xff]
    %v642 = vld [vmem:[%s3 + $0x8] sm:$0xff]
    %v643 = vld [vmem:[%s3 + $0x10] sm:$0xff]
    %v644 = vld [vmem:[%s3 + $0x18] sm:$0xff]
    %v645 = vld [vmem:[%s3 + $0x20] sm:$0xff]
    %v646 = vld [vmem:[%s3 + $0x28] sm:$0xff]
    %v647 = vld [vmem:[%s3 + $0x30] sm:$0xff]
    %v648 = vld [vmem:[%s3 + $0x38] sm:$0xff]
    %v649 = vld [vmem:[%s3 + $0x40] sm:$0xff]
    %v650 = vld [vmem:[%s3 + $0x48] sm:$0xff]
    %v651 = vld [vmem:[%s3 + $0x50] sm:$0xff]
    %v652 = vld [vmem:[%s3 + $0x58] sm:$0xff]
    %v653 = vld [vmem:[%s3 + $0x60] sm:$0xff]
    %v654 = vld [vmem:[%s3 + $0x68] sm:$0xff]
    %v655 = vld [vmem:[%s3 + $0x70] sm:$0xff]
    %v656 = vld [vmem:[%s3 + $0x78] sm:$0xff]
    %v657 = vld [vmem:[%s3 + $0x80] sm:$0xff]
    %v658 = vld [vmem:[%s3 + $0x88] sm:$0xff]
    %v659 = vld [vmem:[%s3 + $0x90] sm:$0xff]
    %v660 = vld [vmem:[%s3 + $0x98] sm:$0xff]
    %v661 = vld [vmem:[%s3 + $0xa0] sm:$0xff]
    %v662 = vld [vmem:[%s3 + $0xa8] sm:$0xff]
    %v663 = vld [vmem:[%s3 + $0xb0] sm:$0xff]
    %v664 = vld [vmem:[%s3 + $0xb8] sm:$0xff]
    %v665 = vld [vmem:[%s3 + $0xc0] sm:$0xff]
    %v666 = vld [vmem:[%s3 + $0xc8] sm:$0xff]
    %v667 = vld [vmem:[%s3 + $0xd0] sm:$0xff]
    %v668 = vld [vmem:[%s3 + $0xd8] sm:$0xff]
    %v669 = vld [vmem:[%s3 + $0xe0] sm:$0xff]
    %v670 = vld [vmem:[%s3 + $0xe8] sm:$0xff]
    %v671 = vld [vmem:[%s3 + $0xf0] sm:$0xff]
    %v672 = vld [vmem:[%s3 + $0xf8] sm:$0xff]
    %v673 = vld [vmem:[%s3 + $0x100] sm:$0xff]
    %v674 = vld [vmem:[%s3 + $0x108] sm:$0xff]
    %v675 = vld [vmem:[%s3 + $0x110] sm:$0xff]
    %v676 = vld [vmem:[%s3 + $0x118] sm:$0xff]
    %v677 = vld [vmem:[%s3 + $0x120] sm:$0xff]
    %v678 = vld [vmem:[%s3 + $0x128] sm:$0xff]
    %v679 = vld [vmem:[%s3 + $0x130] sm:$0xff]
    %v680 = vld [vmem:[%s3 + $0x138] sm:$0xff]
    %v681 = vld [vmem:[%s3 + $0x140] sm:$0xff]
    %v682 = vld [vmem:[%s3 + $0x148] sm:$0xff]
    %v683 = vld [vmem:[%s3 + $0x150] sm:$0xff]
    %v684 = vld [vmem:[%s3 + $0x158] sm:$0xff]
    %v685 = vld [vmem:[%s3 + $0x160] sm:$0xff]
    %v686 = vld [vmem:[%s3 + $0x168] sm:$0xff]
    %v687 = vld [vmem:[%s3 + $0x170] sm:$0xff]
    %v688 = vld [vmem:[%s3 + $0x178] sm:$0xff]
    %v689 = vld [vmem:[%s3 + $0x180] sm:$0xff]
    %v690 = vld [vmem:[%s3 + $0x188] sm:$0xff]
    %v691 = vld [vmem:[%s3 + $0x190] sm:$0xff]
    %v692 = vld [vmem:[%s3 + $0x198] sm:$0xff]
    %v693 = vld [vmem:[%s3 + $0x1a0] sm:$0xff]
    %v694 = vld [vmem:[%s3 + $0x1a8] sm:$0xff]
    %v695 = vld [vmem:[%s3 + $0x1b0] sm:$0xff]
    %v696 = vld [vmem:[%s3 + $0x1b8] sm:$0xff]
    %v697 = vld [vmem:[%s3 + $0x1c0] sm:$0xff]
    %v698 = vld [vmem:[%s3 + $0x1c8] sm:$0xff]
    %v699 = vld [vmem:[%s3 + $0x1d0] sm:$0xff]
    %v700 = vld [vmem:[%s3 + $0x1d8] sm:$0xff]
    %v701 = vld [vmem:[%s3 + $0x1e0] sm:$0xff]
    %v702 = vld [vmem:[%s3 + $0x1e8] sm:$0xff]
    %v703 = vld [vmem:[%s3 + $0x1f0] sm:$0xff]
    %v704 = vld [vmem:[%s3 + $0x1f8] sm:$0xff]
    %v705 = vld [vmem:[%s4] sm:$0xff]
    %v706 = vld [vmem:[%s4 + $0x8] sm:$0xff]
    %v707 = vld [vmem:[%s4 + $0x10] sm:$0xff]
    %v708 = vld [vmem:[%s4 + $0x18] sm:$0xff]
    %v709 = vld [vmem:[%s4 + $0x20] sm:$0xff]
    %v710 = vld [vmem:[%s4 + $0x28] sm:$0xff]
    %v711 = vld [vmem:[%s4 + $0x30] sm:$0xff]
    %v712 = vld [vmem:[%s4 + $0x38] sm:$0xff]
    %v713 = vld [vmem:[%s4 + $0x40] sm:$0xff]
    %v714 = vld [vmem:[%s4 + $0x48] sm:$0xff]
    %v715 = vld [vmem:[%s4 + $0x50] sm:$0xff]
    %v716 = vld [vmem:[%s4 + $0x58] sm:$0xff]
    %v717 = vld [vmem:[%s4 + $0x60] sm:$0xff]
    %v718 = vld [vmem:[%s4 + $0x68] sm:$0xff]
    %v719 = vld [vmem:[%s4 + $0x70] sm:$0xff]
    %v720 = vld [vmem:[%s4 + $0x78] sm:$0xff]
    %v721 = vld [vmem:[%s4 + $0x80] sm:$0xff]
    %v722 = vld [vmem:[%s4 + $0x88] sm:$0xff]
    %v723 = vld [vmem:[%s4 + $0x90] sm:$0xff]
    %v724 = vld [vmem:[%s4 + $0x98] sm:$0xff]
    %v725 = vld [vmem:[%s4 + $0xa0] sm:$0xff]
    %v726 = vld [vmem:[%s4 + $0xa8] sm:$0xff]
    %v727 = vld [vmem:[%s4 + $0xb0] sm:$0xff]
    %v728 = vld [vmem:[%s4 + $0xb8] sm:$0xff]
    %v729 = vld [vmem:[%s4 + $0xc0] sm:$0xff]
    %v730 = vld [vmem:[%s4 + $0xc8] sm:$0xff]
    %v731 = vld [vmem:[%s4 + $0xd0] sm:$0xff]
    %v732 = vld [vmem:[%s4 + $0xd8] sm:$0xff]
    %v733 = vld [vmem:[%s4 + $0xe0] sm:$0xff]
    %v734 = vld [vmem:[%s4 + $0xe8] sm:$0xff]
    %v735 = vld [vmem:[%s4 + $0xf0] sm:$0xff]
    %v736 = vld [vmem:[%s4 + $0xf8] sm:$0xff]
    %738 = vset.pattern.permute.xlu0 0
    %739 = vperm.xlu0 %738, %v705
    %v740 = vpop.permute.xlu0 %739
    %743 = vset.pattern.permute.xlu0 0
    %744 = vperm.xlu0 %743, %v706
    %v745 = vpop.permute.xlu0 %744
    %748 = vset.pattern.permute.xlu0 0
    %749 = vperm.xlu0 %748, %v707
    %v750 = vpop.permute.xlu0 %749
    %753 = vset.pattern.permute.xlu0 0
    %754 = vperm.xlu0 %753, %v708
    %v755 = vpop.permute.xlu0 %754
    %758 = vset.pattern.permute.xlu0 0
    %759 = vperm.xlu0 %758, %v709
    %v760 = vpop.permute.xlu0 %759
    %763 = vset.pattern.permute.xlu0 0
    %764 = vperm.xlu0 %763, %v710
    %v765 = vpop.permute.xlu0 %764
    %768 = vset.pattern.permute.xlu0 0
    %769 = vperm.xlu0 %768, %v711
    %v770 = vpop.permute.xlu0 %769
    %773 = vset.pattern.permute.xlu0 0
    %774 = vperm.xlu0 %773, %v712
    %v775 = vpop.permute.xlu0 %774
    %778 = vset.pattern.permute.xlu0 0
    %779 = vperm.xlu0 %778, %v713
    %v780 = vpop.permute.xlu0 %779
    %783 = vset.pattern.permute.xlu0 0
    %784 = vperm.xlu0 %783, %v714
    %v785 = vpop.permute.xlu0 %784
    %788 = vset.pattern.permute.xlu0 0
    %789 = vperm.xlu0 %788, %v715
    %v790 = vpop.permute.xlu0 %789
    %793 = vset.pattern.permute.xlu0 0
    %794 = vperm.xlu0 %793, %v716
    %v795 = vpop.permute.xlu0 %794
    %798 = vset.pattern.permute.xlu0 0
    %799 = vperm.xlu0 %798, %v717
    %v800 = vpop.permute.xlu0 %799
    %803 = vset.pattern.permute.xlu0 0
    %804 = vperm.xlu0 %803, %v718
    %v805 = vpop.permute.xlu0 %804
    %808 = vset.pattern.permute.xlu0 0
    %809 = vperm.xlu0 %808, %v719
    %v810 = vpop.permute.xlu0 %809
    %813 = vset.pattern.permute.xlu0 0
    %814 = vperm.xlu0 %813, %v720
    %v815 = vpop.permute.xlu0 %814
    %818 = vset.pattern.permute.xlu0 0
    %819 = vperm.xlu0 %818, %v721
    %v820 = vpop.permute.xlu0 %819
    %823 = vset.pattern.permute.xlu0 0
    %824 = vperm.xlu0 %823, %v722
    %v825 = vpop.permute.xlu0 %824
    %828 = vset.pattern.permute.xlu0 0
    %829 = vperm.xlu0 %828, %v723
    %v830 = vpop.permute.xlu0 %829
    %833 = vset.pattern.permute.xlu0 0
    %834 = vperm.xlu0 %833, %v724
    %v835 = vpop.permute.xlu0 %834
    %838 = vset.pattern.permute.xlu0 0
    %839 = vperm.xlu0 %838, %v725
    %v840 = vpop.permute.xlu0 %839
    %843 = vset.pattern.permute.xlu0 0
    %844 = vperm.xlu0 %843, %v726
    %v845 = vpop.permute.xlu0 %844
    %848 = vset.pattern.permute.xlu0 0
    %849 = vperm.xlu0 %848, %v727
    %v850 = vpop.permute.xlu0 %849
    %853 = vset.pattern.permute.xlu0 0
    %854 = vperm.xlu0 %853, %v728
    %v855 = vpop.permute.xlu0 %854
    %858 = vset.pattern.permute.xlu0 0
    %859 = vperm.xlu0 %858, %v729
    %v860 = vpop.permute.xlu0 %859
    %863 = vset.pattern.permute.xlu0 0
    %864 = vperm.xlu0 %863, %v730
    %v865 = vpop.permute.xlu0 %864
    %868 = vset.pattern.permute.xlu0 0
    %869 = vperm.xlu0 %868, %v731
    %v870 = vpop.permute.xlu0 %869
    %873 = vset.pattern.permute.xlu0 0
    %874 = vperm.xlu0 %873, %v732
    %v875 = vpop.permute.xlu0 %874
    %878 = vset.pattern.permute.xlu0 0
    %879 = vperm.xlu0 %878, %v733
    %v880 = vpop.permute.xlu0 %879
    %883 = vset.pattern.permute.xlu0 0
    %884 = vperm.xlu0 %883, %v734
    %v885 = vpop.permute.xlu0 %884
    %888 = vset.pattern.permute.xlu0 0
    %889 = vperm.xlu0 %888, %v735
    %v890 = vpop.permute.xlu0 %889
    %893 = vset.pattern.permute.xlu0 0
    %894 = vperm.xlu0 %893, %v736
    %v895 = vpop.permute.xlu0 %894
    %897 = vmatprep.subr.mxu0 0.0
    %898 = vmatpush1.msra.mxu0 %v609
    %899 = vmatprep.subr.mxu0 0.0
    %900 = vmatpush1.msra.mxu0 %v610
    %901 = vmatprep.subr.mxu0 0.0
    %902 = vmatpush1.msra.mxu0 %v611
    %903 = vmatprep.subr.mxu0 0.0
    %904 = vmatpush1.msra.mxu0 %v612
    %905 = vmatprep.subr.mxu0 0.0
    %906 = vmatpush1.msra.mxu0 %v613
    %907 = vmatprep.subr.mxu0 0.0
    %908 = vmatpush1.msra.mxu0 %v614
    %909 = vmatprep.subr.mxu0 0.0
    %910 = vmatpush1.msra.mxu0 %v615
    %911 = vmatprep.subr.mxu0 0.0
    %912 = vmatpush1.msra.mxu0 %v616
    %913 = vmatprep.subr.mxu0 0.0
    %914 = vmatpush1.msra.mxu0 %v617
    %915 = vmatprep.subr.mxu0 0.0
    %916 = vmatpush1.msra.mxu0 %v618
    %917 = vmatprep.subr.mxu0 0.0
    %918 = vmatpush1.msra.mxu0 %v619
    %919 = vmatprep.subr.mxu0 0.0
    %920 = vmatpush1.msra.mxu0 %v620
    %921 = vmatprep.subr.mxu0 0.0
    %922 = vmatpush1.msra.mxu0 %v621
    %923 = vmatprep.subr.mxu0 0.0
    %924 = vmatpush1.msra.mxu0 %v622
    %925 = vmatprep.subr.mxu0 0.0
    %926 = vmatpush1.msra.mxu0 %v623
    %927 = vmatprep.subr.mxu0 0.0
    %928 = vmatpush1.msra.mxu0 %v624
    %929 = vmatprep.subr.mxu0 0.0
    %930 = vmatpush1.msra.mxu0 %v625
    %931 = vmatprep.subr.mxu0 0.0
    %932 = vmatpush1.msra.mxu0 %v626
    %933 = vmatprep.subr.mxu0 0.0
    %934 = vmatpush1.msra.mxu0 %v627
    %935 = vmatprep.subr.mxu0 0.0
    %936 = vmatpush1.msra.mxu0 %v628
    %937 = vmatprep.subr.mxu0 0.0
    %938 = vmatpush1.msra.mxu0 %v629
    %939 = vmatprep.subr.mxu0 0.0
    %940 = vmatpush1.msra.mxu0 %v630
    %941 = vmatprep.subr.mxu0 0.0
    %942 = vmatpush1.msra.mxu0 %v631
    %943 = vmatprep.subr.mxu0 0.0
    %944 = vmatpush1.msra.mxu0 %v632
    %945 = vmatprep.subr.mxu0 0.0
    %946 = vmatpush1.msra.mxu0 %v633
    %947 = vmatprep.subr.mxu0 0.0
    %948 = vmatpush1.msra.mxu0 %v634
    %949 = vmatprep.subr.mxu0 0.0
    %950 = vmatpush1.msra.mxu0 %v635
    %951 = vmatprep.subr.mxu0 0.0
    %952 = vmatpush1.msra.mxu0 %v636
    %953 = vmatprep.subr.mxu0 0.0
    %954 = vmatpush1.msra.mxu0 %v637
    %955 = vmatprep.subr.mxu0 0.0
    %956 = vmatpush1.msra.mxu0 %v638
    %957 = vmatprep.subr.mxu0 0.0
    %958 = vmatpush1.msra.mxu0 %v639
    %959 = vmatprep.subr.mxu0 0.0
    %960 = vmatpush1.msra.mxu0 %v640
    %961 = vmatprep.mubr.f32.mxu0 %v642
    %962 = vmatmul.mubr.f32.gmra.mrb[0].mxu0 %v641
    %v963 = vpop.f32.mrb[0].mxu0
    %v964 = vadd.f32 %v740, %v963
    %v965 = vpop.f32.mrb[0].mxu0
    %966 = vmatprep.mubr.f32.mxu0 %v644
    %967 = vmatmul.mubr.f32.gmra.mrb[0].mxu0 %v643
    %v968 = vpop.f32.mrb[0].mxu0
    %v969 = vadd.f32 %v745, %v968
    %v970 = vpop.f32.mrb[0].mxu0
    %971 = vmatprep.mubr.f32.mxu0 %v646
    %972 = vmatmul.mubr.f32.gmra.mrb[0].mxu0 %v645
    %v973 = vpop.f32.mrb[0].mxu0
    %v974 = vadd.f32 %v750, %v973
    %v975 = vpop.f32.mrb[0].mxu0
    %976 = vmatprep.mubr.f32.mxu0 %v648
    %977 = vmatmul.mubr.f32.gmra.mrb[0].mxu0 %v647
    %v978 = vpop.f32.mrb[0].mxu0
    %v979 = vadd.f32 %v755, %v978
    %v980 = vpop.f32.mrb[0].mxu0
    %981 = vmatprep.mubr.f32.mxu0 %v650
    %982 = vmatmul.mubr.f32.gmra.mrb[0].mxu0 %v649
    %v983 = vpop.f32.mrb[0].mxu0
    %v984 = vadd.f32 %v760, %v983
    %v985 = vpop.f32.mrb[0].mxu0
    %986 = vmatprep.mubr.f32.mxu0 %v652
    %987 = vmatmul.mubr.f32.gmra.mrb[0].mxu0 %v651
    %v988 = vpop.f32.mrb[0].mxu0
    %v989 = vadd.f32 %v765, %v988
    %v990 = vpop.f32.mrb[0].mxu0
    %991 = vmatprep.mubr.f32.mxu0 %v654
    %992 = vmatmul.mubr.f32.gmra.mrb[0].mxu0 %v653
    %v993 = vpop.f32.mrb[0].mxu0
    %v994 = vadd.f32 %v770, %v993
    %v995 = vpop.f32.mrb[0].mxu0
    %996 = vmatprep.mubr.f32.mxu0 %v656
    %997 = vmatmul.mubr.f32.gmra.mrb[0].mxu0 %v655
    %v998 = vpop.f32.mrb[0].mxu0
    %v999 = vadd.f32 %v775, %v998
    %v1000 = vpop.f32.mrb[0].mxu0
    %1001 = vmatprep.mubr.f32.mxu0 %v658
    %1002 = vmatmul.mubr.f32.gmra.mrb[0].mxu0 %v657
    %v1003 = vpop.f32.mrb[0].mxu0
    %v1004 = vadd.f32 %v780, %v1003
    %v1005 = vpop.f32.mrb[0].mxu0
    %1006 = vmatprep.mubr.f32.mxu0 %v660
    %1007 = vmatmul.mubr.f32.gmra.mrb[0].mxu0 %v659
    %v1008 = vpop.f32.mrb[0].mxu0
    %v1009 = vadd.f32 %v785, %v1008
    %v1010 = vpop.f32.mrb[0].mxu0
    %1011 = vmatprep.mubr.f32.mxu0 %v662
    %1012 = vmatmul.mubr.f32.gmra.mrb[0].mxu0 %v661
    %v1013 = vpop.f32.mrb[0].mxu0
    %v1014 = vadd.f32 %v790, %v1013
    %v1015 = vpop.f32.mrb[0].mxu0
    %1016 = vmatprep.mubr.f32.mxu0 %v664
    %1017 = vmatmul.mubr.f32.gmra.mrb[0].mxu0 %v663
    %v1018 = vpop.f32.mrb[0].mxu0
    %v1019 = vadd.f32 %v795, %v1018
    %v1020 = vpop.f32.mrb[0].mxu0
    %1021 = vmatprep.mubr.f32.mxu0 %v666
    %1022 = vmatmul.mubr.f32.gmra.mrb[0].mxu0 %v665
    %v1023 = vpop.f32.mrb[0].mxu0
    %v1024 = vadd.f32 %v800, %v1023
    %v1025 = vpop.f32.mrb[0].mxu0
    %1026 = vmatprep.mubr.f32.mxu0 %v668
    %1027 = vmatmul.mubr.f32.gmra.mrb[0].mxu0 %v667
    %v1028 = vpop.f32.mrb[0].mxu0
    %v1029 = vadd.f32 %v805, %v1028
    %v1030 = vpop.f32.mrb[0].mxu0
    %1031 = vmatprep.mubr.f32.mxu0 %v670
    %1032 = vmatmul.mubr.f32.gmra.mrb[0].mxu0 %v669
    %v1033 = vpop.f32.mrb[0].mxu0
    %v1034 = vadd.f32 %v810, %v1033
    %v1035 = vpop.f32.mrb[0].mxu0
    %1036 = vmatprep.mubr.f32.mxu0 %v672
    %1037 = vmatmul.mubr.f32.gmra.mrb[0].mxu0 %v671
    %v1038 = vpop.f32.mrb[0].mxu0
    %v1039 = vadd.f32 %v815, %v1038
    %v1040 = vpop.f32.mrb[0].mxu0
    %1041 = vmatprep.mubr.f32.mxu0 %v674
    %1042 = vmatmul.mubr.f32.gmra.mrb[0].mxu0 %v673
    %v1043 = vpop.f32.mrb[0].mxu0
    %v1044 = vadd.f32 %v820, %v1043
    %v1045 = vpop.f32.mrb[0].mxu0
    %1046 = vmatprep.mubr.f32.mxu0 %v676
    %1047 = vmatmul.mubr.f32.gmra.mrb[0].mxu0 %v675
    %v1048 = vpop.f32.mrb[0].mxu0
    %v1049 = vadd.f32 %v825, %v1048
    %v1050 = vpop.f32.mrb[0].mxu0
    %1051 = vmatprep.mubr.f32.mxu0 %v678
    %1052 = vmatmul.mubr.f32.gmra.mrb[0].mxu0 %v677
    %v1053 = vpop.f32.mrb[0].mxu0
    %v1054 = vadd.f32 %v830, %v1053
    %v1055 = vpop.f32.mrb[0].mxu0
    %1056 = vmatprep.mubr.f32.mxu0 %v680
    %1057 = vmatmul.mubr.f32.gmra.mrb[0].mxu0 %v679
    %v1058 = vpop.f32.mrb[0].mxu0
    %v1059 = vadd.f32 %v835, %v1058
    %v1060 = vpop.f32.mrb[0].mxu0
    %1061 = vmatprep.mubr.f32.mxu0 %v682
    %1062 = vmatmul.mubr.f32.gmra.mrb[0].mxu0 %v681
    %v1063 = vpop.f32.mrb[0].mxu0
    %v1064 = vadd.f32 %v840, %v1063
    %v1065 = vpop.f32.mrb[0].mxu0
    %1066 = vmatprep.mubr.f32.mxu0 %v684
    %1067 = vmatmul.mubr.f32.gmra.mrb[0].mxu0 %v683
    %v1068 = vpop.f32.mrb[0].mxu0
    %v1069 = vadd.f32 %v845, %v1068
    %v1070 = vpop.f32.mrb[0].mxu0
    %1071 = vmatprep.mubr.f32.mxu0 %v686
    %1072 = vmatmul.mubr.f32.gmra.mrb[0].mxu0 %v685
    %v1073 = vpop.f32.mrb[0].mxu0
    %v1074 = vadd.f32 %v850, %v1073
    %v1075 = vpop.f32.mrb[0].mxu0
    %1076 = vmatprep.mubr.f32.mxu0 %v688
    %1077 = vmatmul.mubr.f32.gmra.mrb[0].mxu0 %v687
    %v1078 = vpop.f32.mrb[0].mxu0
    %v1079 = vadd.f32 %v855, %v1078
    %v1080 = vpop.f32.mrb[0].mxu0
    %1081 = vmatprep.mubr.f32.mxu0 %v690
    %1082 = vmatmul.mubr.f32.gmra.mrb[0].mxu0 %v689
    %v1083 = vpop.f32.mrb[0].mxu0
    %v1084 = vadd.f32 %v860, %v1083
    %v1085 = vpop.f32.mrb[0].mxu0
    %1086 = vmatprep.mubr.f32.mxu0 %v692
    %1087 = vmatmul.mubr.f32.gmra.mrb[0].mxu0 %v691
    %v1088 = vpop.f32.mrb[0].mxu0
    %v1089 = vadd.f32 %v865, %v1088
    %v1090 = vpop.f32.mrb[0].mxu0
    %1091 = vmatprep.mubr.f32.mxu0 %v694
    %1092 = vmatmul.mubr.f32.gmra.mrb[0].mxu0 %v693
    %v1093 = vpop.f32.mrb[0].mxu0
    %v1094 = vadd.f32 %v870, %v1093
    %v1095 = vpop.f32.mrb[0].mxu0
    %1096 = vmatprep.mubr.f32.mxu0 %v696
    %1097 = vmatmul.mubr.f32.gmra.mrb[0].mxu0 %v695
    %v1098 = vpop.f32.mrb[0].mxu0
    %v1099 = vadd.f32 %v875, %v1098
    %v1100 = vpop.f32.mrb[0].mxu0
    %1101 = vmatprep.mubr.f32.mxu0 %v698
    %1102 = vmatmul.mubr.f32.gmra.mrb[0].mxu0 %v697
    %v1103 = vpop.f32.mrb[0].mxu0
    %v1104 = vadd.f32 %v880, %v1103
    %v1105 = vpop.f32.mrb[0].mxu0
    %1106 = vmatprep.mubr.f32.mxu0 %v700
    %1107 = vmatmul.mubr.f32.gmra.mrb[0].mxu0 %v699
    %v1108 = vpop.f32.mrb[0].mxu0
    %v1109 = vadd.f32 %v885, %v1108
    %v1110 = vpop.f32.mrb[0].mxu0
    %1111 = vmatprep.mubr.f32.mxu0 %v702
    %1112 = vmatmul.mubr.f32.gmra.mrb[0].mxu0 %v701
    %v1113 = vpop.f32.mrb[0].mxu0
    %v1114 = vadd.f32 %v890, %v1113
    %v1115 = vpop.f32.mrb[0].mxu0
    %1116 = vmatprep.mubr.f32.mxu0 %v704
    %1117 = vmatmul.mubr.f32.gmra.mrb[0].mxu0 %v703
    %v1118 = vpop.f32.mrb[0].mxu0
    %v1119 = vadd.f32 %v895, %v1118
    %v1120 = vpop.f32.mrb[0].mxu0
    %1121 = vdwg.mxu0
    %v1122 = vmul.f32 %v964, 0.01
    %v1123 = vmul.f32 %v969, 0.01
    %v1124 = vmul.f32 %v974, 0.01
    %v1125 = vmul.f32 %v979, 0.01
    %v1126 = vmul.f32 %v984, 0.01
    %v1127 = vmul.f32 %v989, 0.01
    %v1128 = vmul.f32 %v994, 0.01
    %v1129 = vmul.f32 %v999, 0.01
    %v1130 = vmul.f32 %v1004, 0.01
    %v1131 = vmul.f32 %v1009, 0.01
    %v1132 = vmul.f32 %v1014, 0.01
    %v1133 = vmul.f32 %v1019, 0.01
    %v1134 = vmul.f32 %v1024, 0.01
    %v1135 = vmul.f32 %v1029, 0.01
    %v1136 = vmul.f32 %v1034, 0.01
    %v1137 = vmul.f32 %v1039, 0.01
    %v1138 = vmul.f32 %v1044, 0.01
    %v1139 = vmul.f32 %v1049, 0.01
    %v1140 = vmul.f32 %v1054, 0.01
    %v1141 = vmul.f32 %v1059, 0.01
    %v1142 = vmul.f32 %v1064, 0.01
    %v1143 = vmul.f32 %v1069, 0.01
    %v1144 = vmul.f32 %v1074, 0.01
    %v1145 = vmul.f32 %v1079, 0.01
    %v1146 = vmul.f32 %v1084, 0.01
    %v1147 = vmul.f32 %v1089, 0.01
    %v1148 = vmul.f32 %v1094, 0.01
    %v1149 = vmul.f32 %v1099, 0.01
    %v1150 = vmul.f32 %v1104, 0.01
    %v1151 = vmul.f32 %v1109, 0.01
    %v1152 = vmul.f32 %v1114, 0.01
    %v1153 = vmul.f32 %v1119, 0.01
    %v1154 = vmax.f32 %v964, %v1122
    %v1155 = vmax.f32 %v969, %v1123
    %v1156 = vmax.f32 %v974, %v1124
    %v1157 = vmax.f32 %v979, %v1125
    %v1158 = vmax.f32 %v984, %v1126
    %v1159 = vmax.f32 %v989, %v1127
    %v1160 = vmax.f32 %v994, %v1128
    %v1161 = vmax.f32 %v999, %v1129
    %v1162 = vmax.f32 %v1004, %v1130
    %v1163 = vmax.f32 %v1009, %v1131
    %v1164 = vmax.f32 %v1014, %v1132
    %v1165 = vmax.f32 %v1019, %v1133
    %v1166 = vmax.f32 %v1024, %v1134
    %v1167 = vmax.f32 %v1029, %v1135
    %v1168 = vmax.f32 %v1034, %v1136
    %v1169 = vmax.f32 %v1039, %v1137
    %v1170 = vmax.f32 %v1044, %v1138
    %v1171 = vmax.f32 %v1049, %v1139
    %v1172 = vmax.f32 %v1054, %v1140
    %v1173 = vmax.f32 %v1059, %v1141
    %v1174 = vmax.f32 %v1064, %v1142
    %v1175 = vmax.f32 %v1069, %v1143
    %v1176 = vmax.f32 %v1074, %v1144
    %v1177 = vmax.f32 %v1079, %v1145
    %v1178 = vmax.f32 %v1084, %v1146
    %v1179 = vmax.f32 %v1089, %v1147
    %v1180 = vmax.f32 %v1094, %v1148
    %v1181 = vmax.f32 %v1099, %v1149
    %v1182 = vmax.f32 %v1104, %v1150
    %v1183 = vmax.f32 %v1109, %v1151
    %v1184 = vmax.f32 %v1114, %v1152
    %v1185 = vmax.f32 %v1119, %v1153
    %v1186 = vld [vmem:[%s5] sm:$0xff]
    %v1187 = vld [vmem:[%s5 + $0x8] sm:$0xff]
    %v1188 = vld [vmem:[%s6] sm:$0xff]
    %1190 = vset.pattern.permute.xlu0 0
    %1191 = vperm.xlu0 %1190, %v1188
    %v1192 = vpop.permute.xlu0 %1191
    %1194 = vmatprep.subr.mxu0 0.0
    %1195 = vmatpush1.msra.mxu0 %v1154
    %1196 = vmatprep.subr.mxu0 0.0
    %1197 = vmatpush1.msra.mxu0 %v1155
    %1198 = vmatprep.subr.mxu0 0.0
    %1199 = vmatpush1.msra.mxu0 %v1156
    %1200 = vmatprep.subr.mxu0 0.0
    %1201 = vmatpush1.msra.mxu0 %v1157
    %1202 = vmatprep.subr.mxu0 0.0
    %1203 = vmatpush1.msra.mxu0 %v1158
    %1204 = vmatprep.subr.mxu0 0.0
    %1205 = vmatpush1.msra.mxu0 %v1159
    %1206 = vmatprep.subr.mxu0 0.0
    %1207 = vmatpush1.msra.mxu0 %v1160
    %1208 = vmatprep.subr.mxu0 0.0
    %1209 = vmatpush1.msra.mxu0 %v1161
    %1210 = vmatprep.subr.mxu0 0.0
    %1211 = vmatpush1.msra.mxu0 %v1162
    %1212 = vmatprep.subr.mxu0 0.0
    %1213 = vmatpush1.msra.mxu0 %v1163
    %1214 = vmatprep.subr.mxu0 0.0
    %1215 = vmatpush1.msra.mxu0 %v1164
    %1216 = vmatprep.subr.mxu0 0.0
    %1217 = vmatpush1.msra.mxu0 %v1165
    %1218 = vmatprep.subr.mxu0 0.0
    %1219 = vmatpush1.msra.mxu0 %v1166
    %1220 = vmatprep.subr.mxu0 0.0
    %1221 = vmatpush1.msra.mxu0 %v1167
    %1222 = vmatprep.subr.mxu0 0.0
    %1223 = vmatpush1.msra.mxu0 %v1168
    %1224 = vmatprep.subr.mxu0 0.0
    %1225 = vmatpush1.msra.mxu0 %v1169
    %1226 = vmatprep.subr.mxu0 0.0
    %1227 = vmatpush1.msra.mxu0 %v1170
    %1228 = vmatprep.subr.mxu0 0.0
    %1229 = vmatpush1.msra.mxu0 %v1171
    %1230 = vmatprep.subr.mxu0 0.0
    %1231 = vmatpush1.msra.mxu0 %v1172
    %1232 = vmatprep.subr.mxu0 0.0
    %1233 = vmatpush1.msra.mxu0 %v1173
    %1234 = vmatprep.subr.mxu0 0.0
    %1235 = vmatpush1.msra.mxu0 %v1174
    %1236 = vmatprep.subr.mxu0 0.0
    %1237 = vmatpush1.msra.mxu0 %v1175
    %1238 = vmatprep.subr.mxu0 0.0
    %1239 = vmatpush1.msra.mxu0 %v1176
    %1240 = vmatprep.subr.mxu0 0.0
    %1241 = vmatpush1.msra.mxu0 %v1177
    %1242 = vmatprep.subr.mxu0 0.0
    %1243 = vmatpush1.msra.mxu0 %v1178
    %1244 = vmatprep.subr.mxu0 0.0
    %1245 = vmatpush1.msra.mxu0 %v1179
    %1246 = vmatprep.subr.mxu0 0.0
    %1247 = vmatpush1.msra.mxu0 %v1180
    %1248 = vmatprep.subr.mxu0 0.0
    %1249 = vmatpush1.msra.mxu0 %v1181
    %1250 = vmatprep.subr.mxu0 0.0
    %1251 = vmatpush1.msra.mxu0 %v1182
    %1252 = vmatprep.subr.mxu0 0.0
    %1253 = vmatpush1.msra.mxu0 %v1183
    %1254 = vmatprep.subr.mxu0 0.0
    %1255 = vmatpush1.msra.mxu0 %v1184
    %1256 = vmatprep.subr.mxu0 0.0
    %1257 = vmatpush1.msra.mxu0 %v1185
    %1258 = vmatprep.mubr.f32.mxu0 %v1187
    %1259 = vmatmul.mubr.f32.gmra.mrb[0].mxu0 %v1186
    %v1260 = vpop.f32.mrb[0].mxu0
    %v1261 = vadd.f32 %v1192, %v1260
    %v1262 = vpop.f32.mrb[0].mxu0
    %1263 = vdwg.mxu0
    %v1264 = vmul.f32 %v1261, 1.442695
    %v1265 = vpow.pop %v1264
    %1266 = vst [vmem:[#allocation2] sm:$0xff] %v1265
    // Predicated region
    $region30: #{tpu_custom_call.1} parent=1 // pred_check
      _
    $region31: #{tpu_custom_call.1} parent=1 // pred_check_branch
      %1268 = sbr.rel (0) target = $region33
    $region32: #{tpu_custom_call.1} parent=1 // pred_region
      %s1270 = ssub.s32 128, 128
      %1271 = vsyncadd [#allocation3], %s1270
      %s1273 = sshll.u32 [#allocation2], 4
      %s1274 = int_to_ptr.vmem [resolvable:$true] %s1273
      %1276 = dma.vmem_to_hbm [thread:$0]  %s1274, 128, %s7, [#allocation3]
    $region33: #{tpu_custom_call.1} parent=1 // pred_fallthru
      _
    // Predicated region
    $region34: #{tpu_custom_call.1} parent=1 // pred_check
      _
    $region35: #{tpu_custom_call.1} parent=1 // pred_check_branch
      %1278 = sbr.rel (0) target = $region37
    $region36: #{tpu_custom_call.1} parent=1 // pred_region
      %1279 = dma.done [#allocation3], 128
    $region37: #{tpu_custom_call.1} parent=1 // pred_fallthru
      _
    %1280 = vsyncpa [#allocation3], 1

</llo_original>
